<compile_context>
chip_gen: v7x
topology: tpu7x:2x2x1
jax: 0.10.0
libtpu: 0.0.40
codegen_flags: <defaults>
</compile_context>

<pallas_src>
import jax
import jax.numpy as jnp
from jax.experimental import pallas as pl
from jax.experimental.pallas import tpu as pltpu


def make_pointnet_kernel(relu_flags, tb, tn, d_pad):
    """Builds a kernel for a fixed layer stack (ReLU pattern baked at trace time)."""
    n_layers = len(relu_flags)

    def kernel(x_ref, *refs):
        # refs = (w0, b0, w1, b1, ..., w{L-1}, b{L-1}, out_ref)
        out_ref = refs[-1]
        kv = pl.program_id(1)

        # Output block is VMEM-resident across the innermost ("arbitrary") point
        # axis: initialize the running max once per batch block.
        @pl.when(kv == 0)
        def _init():
            out_ref[...] = jnp.full_like(out_ref, -jnp.inf)

        c_in = x_ref.shape[2]
        # (TB, TN, C) -> (TB*TN, C): layout-preserving because TN % 8 == 0.
        h = x_ref[...].reshape(tb * tn, c_in).astype(jnp.bfloat16)
        for i in range(n_layers):
            w = refs[2 * i][...]                    # (C_in_i, C_out_i), bf16
            b = refs[2 * i + 1][...]                # (1, C_out_i), f32
            h = jnp.dot(h, w, preferred_element_type=jnp.float32) + b
            if relu_flags[i]:
                h = jnp.maximum(h, 0.0)
            if i < n_layers - 1:
                h = h.astype(jnp.bfloat16)          # bf16 operands for next MXU pass

        # Per-chunk max over the point axis, folded into the running max.
        chunk_max = jnp.max(h.reshape(tb, tn, d_pad), axis=1)
        out_ref[...] = jnp.maximum(out_ref[...], chunk_max)

    return kernel


def init_pointnet_params(key, in_channel, mlps, bn):
    """Deterministic synthetic parameters matching nn.Conv2d/BatchNorm2d shapes."""
    dims = [in_channel] + list(mlps)
    params = []
    for i in range(len(dims) - 1):
        c_in, c_out = dims[i], dims[i + 1]
        key, kw, kb, kg, kbe, km, kv = jax.random.split(key, 7)
        # Conv2d(c_in, c_out, 1): weight (c_out, c_in, 1, 1) -> stored as (c_in, c_out)
        w = jax.random.normal(kw, (c_in, c_out), jnp.float32) * 0.1
        b = jax.random.normal(kb, (c_out,), jnp.float32) * 0.1
        layer = {"w": w, "b": b}
        if bn:
            layer["gamma"] = 1.0 + 0.1 * jax.random.normal(kg, (c_out,), jnp.float32)
            layer["beta"] = 0.1 * jax.random.normal(kbe, (c_out,), jnp.float32)
            layer["running_mean"] = 0.1 * jax.random.normal(km, (c_out,), jnp.float32)
            layer["running_var"] = jnp.abs(
                1.0 + 0.1 * jax.random.normal(kv, (c_out,), jnp.float32)
            )
        params.append(layer)
    return params


def fold_layer(layer, use_bn, eps=1e-5):
    """Fold inference-mode BatchNorm into the 1x1-conv weight/bias."""
    w, b = layer["w"], layer["b"]
    if use_bn:
        scale = layer["gamma"] / jnp.sqrt(layer["running_var"] + eps)
        w_eff = w * scale[None, :]
        b_eff = (b - layer["running_mean"]) * scale + layer["beta"]
    else:
        w_eff, b_eff = w, b
    return w_eff, b_eff.reshape(1, -1)


def _vmem_limit_bytes():
    """Scoped-VMEM request sized per generation (~75% of physical per-core VMEM)."""
    try:
        cap = int(pltpu.get_tpu_info().vmem_capacity_bytes)
    except Exception:
        cap = 64 * 1024 * 1024          # assume the tightest generation (v7x)
    # v7x (64 MiB) -> 48 MiB; v5e/v6e (128 MiB) -> 96 MiB; clamped for safety.
    return max(32 * 1024 * 1024, min(96 * 1024 * 1024, cap * 3 // 4))


_ROW_BYTES = 3 * 1024   # est. VMEM working set per matmul row (see header notes)


def _choose_tiles(B, N, vmem_limit):
    """Pick (TB, TN, B_pad, N_pad) for the (batch, point) grid."""
    # Aim for ~4096 rows per step, but never more than ~half the scoped limit.
    target_rows = min(4096, max(512, (vmem_limit // 2) // _ROW_BYTES))

    # Point-axis tile: multiple of 8 (keeps in-kernel reshapes layout-preserving),
    # capped so per-step intermediates stay bounded even for huge N.
    n8 = ((N + 7) // 8) * 8
    tn_cap = 512
    if n8 <= tn_cap:
        tn, n_pad = n8, n8
    else:
        tn = tn_cap
        n_pad = pl.cdiv(N, tn) * tn

    tb = max(1, target_rows // tn)
    two_block_tb = ((B // 2) // 8) * 8      # largest multiple of 8 giving >= 2 blocks
    if two_block_tb >= 8:
        # Big enough batch: sublane-aligned blocks, and >= 2 batch blocks so the
        # "parallel" axis can be sharded across v7x's two TensorCores.
        tb = min(max(8, (tb // 8) * 8), two_block_tb)
    else:
        tb = B                               # tiny batch: one full-extent block
    b_pad = pl.cdiv(B, tb) * tb
    return tb, tn, b_pad, n_pad


def pointnet_forward(points, params, relu_flags, bn):
    """points: [B, C, N] (PyTorch layout). Returns [B, D]."""
    x = jnp.transpose(points, (0, 2, 1))                        # -> [B, N, C], kept f32
    B, N, c_in = x.shape

    folded = [fold_layer(layer, bn) for layer in params]
    d_out = folded[-1][0].shape[1]
    d_pad = ((d_out + 127) // 128) * 128                        # lane-dense output

    # Zero-pad the final layer to d_pad output channels (padded channels stay
    # exactly zero because the last layer has no ReLU fusion applied to them and
    # zero weight/bias; they are sliced off below).
    w_last, b_last = folded[-1]
    folded[-1] = (
        jnp.pad(w_last, ((0, 0), (0, d_pad - d_out))),
        jnp.pad(b_last, ((0, 0), (0, d_pad - d_out))),
    )

    vmem_limit = _vmem_limit_bytes()
    TB, TN, B_pad, N_pad = _choose_tiles(B, N, vmem_limit)

    if (B_pad, N_pad) != (B, N):
        # Pad by REPLICATION: duplicated points leave the per-example max
        # unchanged; padded batch rows are sliced off after the kernel.
        x = jnp.pad(x, ((0, B_pad - B), (0, N_pad - N), (0, 0)), mode="edge")

    in_specs = [pl.BlockSpec((TB, TN, c_in), lambda bb, kv: (bb, kv, 0))]
    flat_params = []
    for w_eff, b_eff in folded:
        w_bf = w_eff.astype(jnp.bfloat16)
        b_f32 = b_eff.astype(jnp.float32)
        # Constant index maps: weights/biases stay VMEM-resident across steps.
        in_specs.append(pl.BlockSpec(w_bf.shape, lambda bb, kv: (0, 0)))
        in_specs.append(pl.BlockSpec(b_f32.shape, lambda bb, kv: (0, 0)))
        flat_params += [w_bf, b_f32]

    kernel = make_pointnet_kernel(tuple(relu_flags), TB, TN, d_pad)

    out = pl.pallas_call(
        kernel,
        out_shape=jax.ShapeDtypeStruct((B_pad, d_pad), jnp.float32),
        grid_spec=pltpu.PrefetchScalarGridSpec(
            num_scalar_prefetch=0,
            grid=(B_pad // TB, N_pad // TN),
            in_specs=in_specs,
            out_specs=pl.BlockSpec((TB, d_pad), lambda bb, kv: (bb, 0)),
        ),
        compiler_params=pltpu.CompilerParams(
            dimension_semantics=("parallel", "arbitrary"),
            vmem_limit_bytes=vmem_limit,
        ),
    )(x, *flat_params)

    return out[:B, :d_out]


def pointnet_reference(points, params, relu_flags, bn):
    """Pure-JAX reference mirroring the kernel math (bf16 matmul operands, f32 acc)."""
    h = jnp.transpose(points, (0, 2, 1)).astype(jnp.float32)    # [B, N, C]
    for layer, r in zip(params, relu_flags):
        w_eff, b_eff = fold_layer(layer, bn)
        h = jnp.einsum(
            "bnc,cd->bnd",
            h.astype(jnp.bfloat16),
            w_eff.astype(jnp.bfloat16),
            preferred_element_type=jnp.float32,
        ) + b_eff[None]
        if r:
            h = jnp.maximum(h, 0.0)
    return jnp.max(h, axis=1)                                   # [B, D]


if __name__ == "__main__":
    # Module config: PointNet(in_channel=4, mlps=[32, 64, 16], relu=[T, T, F], bn=True)
    in_channel = 4
    mlps = [32, 64, 16]
    relu_flags = [True, True, False]
    bn = True

    B, N = 2, 16

    key = jax.random.PRNGKey(0)
    kx, kp = jax.random.split(key)
    points = jax.random.normal(kx, (B, in_channel, N), jnp.float32)  # [B, C, N]
    params = init_pointnet_params(kp, in_channel, mlps, bn)

    out = pointnet_forward(points, params, relu_flags, bn)
    out = jax.block_until_ready(out)

    ref = pointnet_reference(points, params, relu_flags, bn)
    assert out.shape == (B, mlps[-1]), out.shape
    assert jnp.allclose(out, ref, atol=5e-3, rtol=5e-3), (out, ref)

    print("KERNEL_OK")
</pallas_src>

<mosaic_0001>
module attributes {stable_mosaic.version = 11 : i64} {
  func.func @kernel(%arg0: i32, %arg1: i32, %arg2: memref<2x16x4xf32, #tpu.memory_space<vmem>>, %arg3: memref<4x32xbf16, #tpu.memory_space<vmem>>, %arg4: memref<1x32xf32, #tpu.memory_space<vmem>>, %arg5: memref<32x64xbf16, #tpu.memory_space<vmem>>, %arg6: memref<1x64xf32, #tpu.memory_space<vmem>>, %arg7: memref<64x128xbf16, #tpu.memory_space<vmem>>, %arg8: memref<1x128xf32, #tpu.memory_space<vmem>>, %arg9: memref<2x128xf32, #tpu.memory_space<vmem>>) attributes {dimension_semantics = [#tpu.dimension_semantics<parallel>, #tpu.dimension_semantics<arbitrary>], iteration_bounds = array<i64: 1, 1>, scalar_prefetch = 0 : i64, scratch_operands = 0 : i64, tpu.core_type = #tpu.core_type<tc>, window_params = [{transform_indices = @transform_0, window_bounds = array<i64: 2, 16, 4>}, {pipeline_mode = #tpu.pipeline_mode<synchronous>, transform_indices = @transform_1, window_bounds = array<i64: 4, 32>}, {pipeline_mode = #tpu.pipeline_mode<synchronous>, transform_indices = @transform_2, window_bounds = array<i64: 1, 32>}, {pipeline_mode = #tpu.pipeline_mode<synchronous>, transform_indices = @transform_3, window_bounds = array<i64: 32, 64>}, {pipeline_mode = #tpu.pipeline_mode<synchronous>, transform_indices = @transform_4, window_bounds = array<i64: 1, 64>}, {pipeline_mode = #tpu.pipeline_mode<synchronous>, transform_indices = @transform_5, window_bounds = array<i64: 64, 128>}, {pipeline_mode = #tpu.pipeline_mode<synchronous>, transform_indices = @transform_6, window_bounds = array<i64: 1, 128>}, {transform_indices = @transform_7, window_bounds = array<i64: 2, 128>}]} {
    %c0_i32 = arith.constant 0 : i32
    %0 = arith.cmpi eq, %arg1, %c0_i32 : i32
    %1 = arith.extui %0 : i1 to i32
    %c0_i32_0 = arith.constant 0 : i32
    %2 = arith.cmpi ne, %1, %c0_i32_0 : i32
    scf.if %2 {
      %cst_24 = arith.constant 0xFF800000 : f32
      %32 = vector.broadcast %cst_24 : f32 to vector<2x128xf32>
      %c0_25 = arith.constant 0 : index
      %c0_26 = arith.constant 0 : index
      %33 = vector.load %arg9[%c0_25, %c0_26] : memref<2x128xf32, #tpu.memory_space<vmem>>, vector<2x128xf32>
      tpu.vector_store %arg9[%c0_25, %c0_26], %32 {strides = array<i32>} : memref<2x128xf32, #tpu.memory_space<vmem>>, vector<2x128xf32>,
    } else {
    }
    %c0 = arith.constant 0 : index
    %c0_1 = arith.constant 0 : index
    %c0_2 = arith.constant 0 : index
    %3 = vector.load %arg2[%c0, %c0_1, %c0_2] : memref<2x16x4xf32, #tpu.memory_space<vmem>>, vector<2x16x4xf32>
    %4 = vector.shape_cast %3 : vector<2x16x4xf32> to vector<32x4xf32>
    %5 = arith.truncf %4 : vector<32x4xf32> to vector<32x4xbf16>
    %c0_3 = arith.constant 0 : index
    %c0_4 = arith.constant 0 : index
    %6 = vector.load %arg3[%c0_3, %c0_4] : memref<4x32xbf16, #tpu.memory_space<vmem>>, vector<4x32xbf16>
    %c0_5 = arith.constant 0 : index
    %c0_6 = arith.constant 0 : index
    %7 = vector.load %arg4[%c0_5, %c0_6] : memref<1x32xf32, #tpu.memory_space<vmem>>, vector<1x32xf32>
    %cst = arith.constant dense<0.000000e+00> : vector<32x32xf32>
    %8 = tpu.matmul %5, %6, %cst {dimension_numbers = #tpu.dot_dimension_numbers<[1], [0], [0], [1], [0, 0, 1, 1], [], []>} : vector<32x4xbf16>, vector<4x32xbf16>, vector<32x32xf32> -> vector<32x32xf32>
    %9 = vector.broadcast %7 : vector<1x32xf32> to vector<32x32xf32>
    %10 = arith.addf %8, %9 : vector<32x32xf32>
    %cst_7 = arith.constant 0.000000e+00 : f32
    %11 = vector.broadcast %cst_7 : f32 to vector<32x32xf32>
    %12 = arith.maximumf %10, %11 : vector<32x32xf32>
    %13 = arith.truncf %12 : vector<32x32xf32> to vector<32x32xbf16>
    %c0_8 = arith.constant 0 : index
    %c0_9 = arith.constant 0 : index
    %14 = vector.load %arg5[%c0_8, %c0_9] : memref<32x64xbf16, #tpu.memory_space<vmem>>, vector<32x64xbf16>
    %c0_10 = arith.constant 0 : index
    %c0_11 = arith.constant 0 : index
    %15 = vector.load %arg6[%c0_10, %c0_11] : memref<1x64xf32, #tpu.memory_space<vmem>>, vector<1x64xf32>
    %cst_12 = arith.constant dense<0.000000e+00> : vector<32x64xf32>
    %16 = tpu.matmul %13, %14, %cst_12 {dimension_numbers = #tpu.dot_dimension_numbers<[1], [0], [0], [1], [0, 0, 1, 1], [], []>} : vector<32x32xbf16>, vector<32x64xbf16>, vector<32x64xf32> -> vector<32x64xf32>
    %17 = vector.broadcast %15 : vector<1x64xf32> to vector<32x64xf32>
    %18 = arith.addf %16, %17 : vector<32x64xf32>
    %cst_13 = arith.constant 0.000000e+00 : f32
    %19 = vector.broadcast %cst_13 : f32 to vector<32x64xf32>
    %20 = arith.maximumf %18, %19 : vector<32x64xf32>
    %21 = arith.truncf %20 : vector<32x64xf32> to vector<32x64xbf16>
    %c0_14 = arith.constant 0 : index
    %c0_15 = arith.constant 0 : index
    %22 = vector.load %arg7[%c0_14, %c0_15] : memref<64x128xbf16, #tpu.memory_space<vmem>>, vector<64x128xbf16>
    %c0_16 = arith.constant 0 : index
    %c0_17 = arith.constant 0 : index
    %23 = vector.load %arg8[%c0_16, %c0_17] : memref<1x128xf32, #tpu.memory_space<vmem>>, vector<1x128xf32>
    %cst_18 = arith.constant dense<0.000000e+00> : vector<32x128xf32>
    %24 = tpu.matmul %21, %22, %cst_18 {dimension_numbers = #tpu.dot_dimension_numbers<[1], [0], [0], [1], [0, 0, 1, 1], [], []>} : vector<32x64xbf16>, vector<64x128xbf16>, vector<32x128xf32> -> vector<32x128xf32>
    %25 = vector.broadcast %23 : vector<1x128xf32> to vector<32x128xf32>
    %26 = arith.addf %24, %25 : vector<32x128xf32>
    %27 = vector.shape_cast %26 : vector<32x128xf32> to vector<2x16x128xf32>
    %cst_19 = arith.constant dense<0xFF800000> : vector<2x128xf32>
    %28 = vector.multi_reduction <maximumf>, %27, %cst_19 [1] : vector<2x16x128xf32> to vector<2x128xf32>
    %c0_20 = arith.constant 0 : index
    %c0_21 = arith.constant 0 : index
    %29 = vector.load %arg9[%c0_20, %c0_21] : memref<2x128xf32, #tpu.memory_space<vmem>>, vector<2x128xf32>
    %30 = arith.maximumf %29, %28 : vector<2x128xf32>
    %c0_22 = arith.constant 0 : index
    %c0_23 = arith.constant 0 : index
    %31 = vector.load %arg9[%c0_22, %c0_23] : memref<2x128xf32, #tpu.memory_space<vmem>>, vector<2x128xf32>
    tpu.vector_store %arg9[%c0_22, %c0_23], %30 {strides = array<i32>} : memref<2x128xf32, #tpu.memory_space<vmem>>, vector<2x128xf32>,
    return
  }
  func.func @transform_0(%arg0: i32, %arg1: i32) -> (i32, i32, i32) {
    %c0_i32 = arith.constant 0 : i32
    %c0_i32_0 = arith.constant 0 : i32
    return %arg0, %arg1, %c0_i32 : i32, i32, i32
  }
  func.func @transform_1(%arg0: i32, %arg1: i32) -> (i32, i32) {
    %c0_i32 = arith.constant 0 : i32
    %c0_i32_0 = arith.constant 0 : i32
    %c0_i32_1 = arith.constant 0 : i32
    return %c0_i32, %c0_i32_0 : i32, i32
  }
  func.func @transform_2(%arg0: i32, %arg1: i32) -> (i32, i32) {
    %c0_i32 = arith.constant 0 : i32
    %c0_i32_0 = arith.constant 0 : i32
    %c0_i32_1 = arith.constant 0 : i32
    return %c0_i32, %c0_i32_0 : i32, i32
  }
  func.func @transform_3(%arg0: i32, %arg1: i32) -> (i32, i32) {
    %c0_i32 = arith.constant 0 : i32
    %c0_i32_0 = arith.constant 0 : i32
    %c0_i32_1 = arith.constant 0 : i32
    return %c0_i32, %c0_i32_0 : i32, i32
  }
  func.func @transform_4(%arg0: i32, %arg1: i32) -> (i32, i32) {
    %c0_i32 = arith.constant 0 : i32
    %c0_i32_0 = arith.constant 0 : i32
    %c0_i32_1 = arith.constant 0 : i32
    return %c0_i32, %c0_i32_0 : i32, i32
  }
  func.func @transform_5(%arg0: i32, %arg1: i32) -> (i32, i32) {
    %c0_i32 = arith.constant 0 : i32
    %c0_i32_0 = arith.constant 0 : i32
    %c0_i32_1 = arith.constant 0 : i32
    return %c0_i32, %c0_i32_0 : i32, i32
  }
  func.func @transform_6(%arg0: i32, %arg1: i32) -> (i32, i32) {
    %c0_i32 = arith.constant 0 : i32
    %c0_i32_0 = arith.constant 0 : i32
    %c0_i32_1 = arith.constant 0 : i32
    return %c0_i32, %c0_i32_0 : i32, i32
  }
  func.func @transform_7(%arg0: i32, %arg1: i32) -> (i32, i32) {
    %c0_i32 = arith.constant 0 : i32
    %c0_i32_0 = arith.constant 0 : i32
    return %arg0, %c0_i32 : i32, i32
  }
}

</mosaic_0001>

<llo_original>
// kernel: tpu_custom_call.1
$region0: #{tpu_custom_call.1}
  #allocation0 [shape = 'u32[]', space=smem, size = 0x4, offset = 0x4, fixed_abs, tag = 'smem constant byte address 0x4 - core index']
  #allocation1 [shape = 'u32[144,128]{1,0:T(1,128)}', space=vmem, size = 0x12000, scoped, tag = 'internal scratch']
  %s0 = inlined_call_operand.vmem [shape: f32[2,16,4], index: 0, kind: input, shape index: {}]
  %s1 = inlined_call_operand.vmem [shape: bf16[4,32], index: 1, kind: input, shape index: {}]
  %s2 = inlined_call_operand.vmem [shape: f32[1,32], index: 2, kind: input, shape index: {}]
  %s3 = inlined_call_operand.vmem [shape: bf16[32,64], index: 3, kind: input, shape index: {}]
  %s4 = inlined_call_operand.vmem [shape: f32[1,64], index: 4, kind: input, shape index: {}]
  %s5 = inlined_call_operand.vmem [shape: bf16[64,128], index: 5, kind: input, shape index: {}]
  %s6 = inlined_call_operand.vmem [shape: f32[1,128], index: 6, kind: input, shape index: {}]
  %s7 = inlined_call_operand.hbm [shape: f32[2,128], index: 7, kind: output, shape index: {}]
  %s8 = sld [smem:[#allocation0]]
  $region42: #{tpu_custom_call.1} parent=0
    _
  %s10 = ssub.s32 1, %s8
  %s11 = scalar_select 0, %s10, %s8
  $region1: #{tpu_custom_call.1} parent=0
    #allocation2 [shape = 'u8[1024]{0}', space=vmem, size = 0x400, scoped, tag = 'output window, operand 0, single buffered']
    #allocation3 [shape = 's32[1]{0}', space=sflag, size = 0x4, scoped, tag = 'scoped memory for tpu_custom_call.1']
    %12 = vsyncpa [#allocation3], 0
    // Predicated region
    $region2: #{tpu_custom_call.1} parent=1 // pred_check
      _
    $region3: #{tpu_custom_call.1} parent=1 // pred_check_branch
      %14 = sbr.rel (0) target = $region5
    $region4: #{tpu_custom_call.1} parent=1 // pred_region
      _
    $region5: #{tpu_custom_call.1} parent=1 // pred_fallthru
      _
    // Predicated region
    $region6: #{tpu_custom_call.1} parent=1 // pred_check
      _
    $region7: #{tpu_custom_call.1} parent=1 // pred_check_branch
      %16 = sbr.rel (0) target = $region9
    $region8: #{tpu_custom_call.1} parent=1 // pred_region
      _
    $region9: #{tpu_custom_call.1} parent=1 // pred_fallthru
      _
    // Predicated region
    $region10: #{tpu_custom_call.1} parent=1 // pred_check
      _
    $region11: #{tpu_custom_call.1} parent=1 // pred_check_branch
      %18 = sbr.rel (0) target = $region13
    $region12: #{tpu_custom_call.1} parent=1 // pred_region
      _
    $region13: #{tpu_custom_call.1} parent=1 // pred_fallthru
      _
    // Predicated region
    $region14: #{tpu_custom_call.1} parent=1 // pred_check
      _
    $region15: #{tpu_custom_call.1} parent=1 // pred_check_branch
      %20 = sbr.rel (0) target = $region17
    $region16: #{tpu_custom_call.1} parent=1 // pred_region
      _
    $region17: #{tpu_custom_call.1} parent=1 // pred_fallthru
      _
    // Predicated region
    $region18: #{tpu_custom_call.1} parent=1 // pred_check
      _
    $region19: #{tpu_custom_call.1} parent=1 // pred_check_branch
      %22 = sbr.rel (0) target = $region21
    $region20: #{tpu_custom_call.1} parent=1 // pred_region
      _
    $region21: #{tpu_custom_call.1} parent=1 // pred_fallthru
      _
    // Predicated region
    $region22: #{tpu_custom_call.1} parent=1 // pred_check
      _
    $region23: #{tpu_custom_call.1} parent=1 // pred_check_branch
      %24 = sbr.rel (0) target = $region25
    $region24: #{tpu_custom_call.1} parent=1 // pred_region
      _
    $region25: #{tpu_custom_call.1} parent=1 // pred_fallthru
      _
    // Predicated region
    $region26: #{tpu_custom_call.1} parent=1 // pred_check
      _
    $region27: #{tpu_custom_call.1} parent=1 // pred_check_branch
      %26 = sbr.rel (0) target = $region29
    $region28: #{tpu_custom_call.1} parent=1 // pred_region
      _
    $region29: #{tpu_custom_call.1} parent=1 // pred_fallthru
      _
    %p28 = scmp.eq.s32.totalorder 0, 0
    // Predicated region
    $region30: #{tpu_custom_call.1} parent=1 // pred_check
      %p29 = pneg %p28
    $region31: #{tpu_custom_call.1} parent=1 // pred_check_branch
      %31 = sbr.rel (%p29) target = $region33
    $region32: #{tpu_custom_call.1} parent=1 // pred_region
      %32 = vst [vmem:[#allocation2] sm:$0x3] -inf
    $region33: #{tpu_custom_call.1} parent=1 // pred_fallthru
      _
    %v33 = vld [vmem:[%s0] sm:$0xff]
    %v34 = vld [vmem:[%s0 + $0x8] sm:$0xff]
    %v35 = vld [vmem:[%s0 + $0x10] sm:$0xff]
    %v36 = vld [vmem:[%s0 + $0x18] sm:$0xff]
    %v37 = vpack.c.bf16 %v34, %v33
    %v38 = vpack.c.bf16 %v36, %v35
    %v39 = vld [vmem:[%s1] sm:$0x3]
    %v40 = vld [vmem:[%s2] sm:$0x1]
    %v42 = vlaneseq
    %v43 = vshrl.u32 %v42, 7
    %v44 = vsub.s32 0, %v43
    %v45 = vrot.slane %v40, %v44
    %vm47 = vcmask 31744
    %v49 = vsel %vm47, %v37, 0
    %v52 = vsel %vm47, %v38, 0
    %vm54 = vcmask 1041408
    %v56 = vsel %vm54, %v39, 0
    %58 = vmatprep.subr.bf16.mxu0 0
    %59 = vmatpush1.bf16.msra.mxu0 %v56
    %60 = vmatprep.subr.bf16.mxu0 0
    %61 = vmatpush1.bf16.msra.mxu0 0
    %62 = vmatprep.subr.bf16.mxu0 0
    %63 = vmatpush1.bf16.msra.mxu0 0
    %64 = vmatprep.subr.bf16.mxu0 0
    %65 = vmatpush1.bf16.msra.mxu0 0
    %66 = vmatprep.subr.bf16.mxu0 0
    %67 = vmatpush1.bf16.msra.mxu0 0
    %68 = vmatprep.subr.bf16.mxu0 0
    %69 = vmatpush1.bf16.msra.mxu0 0
    %70 = vmatprep.subr.bf16.mxu0 0
    %71 = vmatpush1.bf16.msra.mxu0 0
    %72 = vmatprep.subr.bf16.mxu0 0
    %73 = vmatpush1.bf16.msra.mxu0 0
    %74 = vmatprep.subr.bf16.mxu0 0
    %75 = vmatpush1.bf16.msra.mxu0 0
    %76 = vmatprep.subr.bf16.mxu0 0
    %77 = vmatpush1.bf16.msra.mxu0 0
    %78 = vmatprep.subr.bf16.mxu0 0
    %79 = vmatpush1.bf16.msra.mxu0 0
    %80 = vmatprep.subr.bf16.mxu0 0
    %81 = vmatpush1.bf16.msra.mxu0 0
    %82 = vmatprep.subr.bf16.mxu0 0
    %83 = vmatpush1.bf16.msra.mxu0 0
    %84 = vmatprep.subr.bf16.mxu0 0
    %85 = vmatpush1.bf16.msra.mxu0 0
    %86 = vmatprep.subr.bf16.mxu0 0
    %87 = vmatpush1.bf16.msra.mxu0 0
    %88 = vmatprep.subr.bf16.mxu0 0
    %89 = vmatpush1.bf16.msra.mxu0 0
    %90 = vmatprep.mubr.bf16.mxu0 0
    %91 = vmatmul.mubr.bf16.gmra.mrb[0].mxu0 %v49
    %v92 = vpop.f32.mrb[0].mxu0
    %v93 = vadd.f32 %v45, %v92
    %v94 = vpop.f32.mrb[0].mxu0
    %v95 = vpop.f32.mrb[0].mxu0
    %v96 = vadd.f32 %v45, %v95
    %v97 = vpop.f32.mrb[0].mxu0
    %98 = vmatprep.mubr.bf16.mxu0 0
    %99 = vmatmul.mubr.bf16.gmra.mrb[0].mxu0 %v52
    %v100 = vpop.f32.mrb[0].mxu0
    %v101 = vadd.f32 %v45, %v100
    %v102 = vpop.f32.mrb[0].mxu0
    %v103 = vpop.f32.mrb[0].mxu0
    %v104 = vadd.f32 %v45, %v103
    %v105 = vpop.f32.mrb[0].mxu0
    %106 = vdwg.mxu0
    %v107 = vmax.f32 %v93, 0.0
    %v108 = vmax.f32 %v96, 0.0
    %v109 = vmax.f32 %v101, 0.0
    %v110 = vmax.f32 %v104, 0.0
    %v111 = vpack.c.bf16 %v108, %v107
    %v112 = vpack.c.bf16 %v110, %v109
    %v113 = vld [vmem:[%s3] sm:$0xf]
    %v114 = vld [vmem:[%s3 + $0x4] sm:$0xf]
    %v115 = vld [vmem:[%s3 + $0x8] sm:$0xf]
    %v116 = vld [vmem:[%s3 + $0xc] sm:$0xf]
    %v117 = vld [vmem:[%s4] sm:$0x1]
    %v119 = vlaneseq
    %v120 = vshrl.u32 %v119, 7
    %v121 = vsub.s32 0, %v120
    %v122 = vrot.slane %v117, %v121
    %v128 = vunpack.c.l.b16 %v113
    %v129 = vunpack.c.l.b16 %v114
    %v130 = vunpack.c.l.b16 %v115
    %v131 = vunpack.c.l.b16 %v116
    %v132 = vpack.c.b16 %v129, %v128
    %v133 = vpack.c.b16 %v131, %v130
    %vm136 = vcmask 261120
    %v138 = vsel %vm136, %v111, 0
    %v141 = vsel %vm136, %v112, 0
    %143 = vmatprep.subr.bf16.mxu0 0
    %144 = vmatpush1.bf16.msra.mxu0 %v132
    %145 = vmatprep.subr.bf16.mxu0 0
    %146 = vmatpush1.bf16.msra.mxu0 %v133
    %147 = vmatprep.subr.bf16.mxu0 0
    %148 = vmatpush1.bf16.msra.mxu0 0
    %149 = vmatprep.subr.bf16.mxu0 0
    %150 = vmatpush1.bf16.msra.mxu0 0
    %151 = vmatprep.subr.bf16.mxu0 0
    %152 = vmatpush1.bf16.msra.mxu0 0
    %153 = vmatprep.subr.bf16.mxu0 0
    %154 = vmatpush1.bf16.msra.mxu0 0
    %155 = vmatprep.subr.bf16.mxu0 0
    %156 = vmatpush1.bf16.msra.mxu0 0
    %157 = vmatprep.subr.bf16.mxu0 0
    %158 = vmatpush1.bf16.msra.mxu0 0
    %159 = vmatprep.subr.bf16.mxu0 0
    %160 = vmatpush1.bf16.msra.mxu0 0
    %161 = vmatprep.subr.bf16.mxu0 0
    %162 = vmatpush1.bf16.msra.mxu0 0
    %163 = vmatprep.subr.bf16.mxu0 0
    %164 = vmatpush1.bf16.msra.mxu0 0
    %165 = vmatprep.subr.bf16.mxu0 0
    %166 = vmatpush1.bf16.msra.mxu0 0
    %167 = vmatprep.subr.bf16.mxu0 0
    %168 = vmatpush1.bf16.msra.mxu0 0
    %169 = vmatprep.subr.bf16.mxu0 0
    %170 = vmatpush1.bf16.msra.mxu0 0
    %171 = vmatprep.subr.bf16.mxu0 0
    %172 = vmatpush1.bf16.msra.mxu0 0
    %173 = vmatprep.subr.bf16.mxu0 0
    %174 = vmatpush1.bf16.msra.mxu0 0
    %175 = vmatprep.mubr.bf16.mxu0 0
    %176 = vmatmul.mubr.bf16.gmra.mrb[0].mxu0 %v138
    %v177 = vpop.f32.mrb[0].mxu0
    %v178 = vadd.f32 %v122, %v177
    %v179 = vpop.f32.mrb[0].mxu0
    %v180 = vpop.f32.mrb[0].mxu0
    %v181 = vadd.f32 %v122, %v180
    %v182 = vpop.f32.mrb[0].mxu0
    %183 = vmatprep.mubr.bf16.mxu0 0
    %184 = vmatmul.mubr.bf16.gmra.mrb[0].mxu0 %v141
    %v185 = vpop.f32.mrb[0].mxu0
    %v186 = vadd.f32 %v122, %v185
    %v187 = vpop.f32.mrb[0].mxu0
    %v188 = vpop.f32.mrb[0].mxu0
    %v189 = vadd.f32 %v122, %v188
    %v190 = vpop.f32.mrb[0].mxu0
    %191 = vdwg.mxu0
    %v192 = vmax.f32 %v178, 0.0
    %v193 = vmax.f32 %v181, 0.0
    %v194 = vmax.f32 %v186, 0.0
    %v195 = vmax.f32 %v189, 0.0
    %v196 = vpack.c.bf16 %v193, %v192
    %v197 = vpack.c.bf16 %v195, %v194
    %v198 = vld [vmem:[%s5] sm:$0xf]
    %v199 = vld [vmem:[%s5 + $0x4] sm:$0xf]
    %v200 = vld [vmem:[%s5 + $0x8] sm:$0xf]
    %v201 = vld [vmem:[%s5 + $0xc] sm:$0xf]
    %v202 = vld [vmem:[%s5 + $0x10] sm:$0xf]
    %v203 = vld [vmem:[%s5 + $0x14] sm:$0xf]
    %v204 = vld [vmem:[%s5 + $0x18] sm:$0xf]
    %v205 = vld [vmem:[%s5 + $0x1c] sm:$0xf]
    %v206 = vld [vmem:[%s6] sm:$0x1]
    %v208 = vlaneseq
    %v209 = vshrl.u32 %v208, 7
    %v210 = vsub.s32 0, %v209
    %v211 = vrot.slane %v206, %v210
    %v221 = vunpack.c.l.b16 %v198
    %v222 = vunpack.c.l.b16 %v199
    %v223 = vunpack.c.l.b16 %v200
    %v224 = vunpack.c.l.b16 %v201
    %v225 = vunpack.c.l.b16 %v202
    %v226 = vunpack.c.l.b16 %v203
    %v227 = vunpack.c.l.b16 %v204
    %v228 = vunpack.c.l.b16 %v205
    %v229 = vpack.c.b16 %v222, %v221
    %v230 = vpack.c.b16 %v224, %v223
    %v231 = vpack.c.b16 %v226, %v225
    %v232 = vpack.c.b16 %v228, %v227
    %vm237 = vcmask 523264
    %v239 = vsel %vm237, %v196, 0
    %v242 = vsel %vm237, %v197, 0
    %244 = vmatprep.subr.bf16.mxu0 0
    %245 = vmatpush1.bf16.msra.mxu0 %v229
    %246 = vmatprep.subr.bf16.mxu0 0
    %247 = vmatpush1.bf16.msra.mxu0 %v230
    %248 = vmatprep.subr.bf16.mxu0 0
    %249 = vmatpush1.bf16.msra.mxu0 %v231
    %250 = vmatprep.subr.bf16.mxu0 0
    %251 = vmatpush1.bf16.msra.mxu0 %v232
    %252 = vmatprep.subr.bf16.mxu0 0
    %253 = vmatpush1.bf16.msra.mxu0 0
    %254 = vmatprep.subr.bf16.mxu0 0
    %255 = vmatpush1.bf16.msra.mxu0 0
    %256 = vmatprep.subr.bf16.mxu0 0
    %257 = vmatpush1.bf16.msra.mxu0 0
    %258 = vmatprep.subr.bf16.mxu0 0
    %259 = vmatpush1.bf16.msra.mxu0 0
    %260 = vmatprep.subr.bf16.mxu0 0
    %261 = vmatpush1.bf16.msra.mxu0 0
    %262 = vmatprep.subr.bf16.mxu0 0
    %263 = vmatpush1.bf16.msra.mxu0 0
    %264 = vmatprep.subr.bf16.mxu0 0
    %265 = vmatpush1.bf16.msra.mxu0 0
    %266 = vmatprep.subr.bf16.mxu0 0
    %267 = vmatpush1.bf16.msra.mxu0 0
    %268 = vmatprep.subr.bf16.mxu0 0
    %269 = vmatpush1.bf16.msra.mxu0 0
    %270 = vmatprep.subr.bf16.mxu0 0
    %271 = vmatpush1.bf16.msra.mxu0 0
    %272 = vmatprep.subr.bf16.mxu0 0
    %273 = vmatpush1.bf16.msra.mxu0 0
    %274 = vmatprep.subr.bf16.mxu0 0
    %275 = vmatpush1.bf16.msra.mxu0 0
    %276 = vmatprep.mubr.bf16.mxu0 0
    %277 = vmatmul.mubr.bf16.gmra.mrb[0].mxu0 %v239
    %v278 = vpop.f32.mrb[0].mxu0
    %v279 = vadd.f32 %v211, %v278
    %v280 = vpop.f32.mrb[0].mxu0
    %v281 = vpop.f32.mrb[0].mxu0
    %v282 = vadd.f32 %v211, %v281
    %v283 = vpop.f32.mrb[0].mxu0
    %284 = vmatprep.mubr.bf16.mxu0 0
    %285 = vmatmul.mubr.bf16.gmra.mrb[0].mxu0 %v242
    %v286 = vpop.f32.mrb[0].mxu0
    %v287 = vadd.f32 %v211, %v286
    %v288 = vpop.f32.mrb[0].mxu0
    %v289 = vpop.f32.mrb[0].mxu0
    %v290 = vadd.f32 %v211, %v289
    %v291 = vpop.f32.mrb[0].mxu0
    %292 = vdwg.mxu0
    %v293 = vmax.f32 %v279, %v282
    %v294 = vrot.slane %v293, 4
    %v295 = vmax.f32 %v293, %v294
    %v296 = vrot.slane %v295, 2
    %v297 = vmax.f32 %v295, %v296
    %v298 = vrot.slane %v297, 1
    %v299 = vmax.f32 %v297, %v298
    %v300 = vmax.f32 %v287, %v290
    %v301 = vrot.slane %v300, 4
    %v302 = vmax.f32 %v300, %v301
    %v303 = vrot.slane %v302, 2
    %v304 = vmax.f32 %v302, %v303
    %v305 = vrot.slane %v304, 1
    %v306 = vmax.f32 %v304, %v305
    %v307 = vld [vmem:[#allocation2] sm:$0x3]
    %vm310 = vcmask 1041409
    %v311 = vsel %vm310, %v306, %v299
    %v313 = vmax.f32 %v307, %v311
    %314 = vst [vmem:[#allocation2] sm:$0x3] %v313
    // Predicated region
    $region34: #{tpu_custom_call.1} parent=1 // pred_check
      _
    $region35: #{tpu_custom_call.1} parent=1 // pred_check_branch
      %316 = sbr.rel (0) target = $region37
    $region36: #{tpu_custom_call.1} parent=1 // pred_region
      %s318 = ssub.s32 32, 32
      %319 = vsyncadd [#allocation3], %s318
      %s321 = sshll.u32 [#allocation2], 4
      %s322 = int_to_ptr.vmem [resolvable:$true] %s321
      %324 = dma.vmem_to_hbm [thread:$0]  %s322, 32, %s7, [#allocation3]
    $region37: #{tpu_custom_call.1} parent=1 // pred_fallthru
      _
    // Predicated region
    $region38: #{tpu_custom_call.1} parent=1 // pred_check
      _
    $region39: #{tpu_custom_call.1} parent=1 // pred_check_branch
      %326 = sbr.rel (0) target = $region41
    $region40: #{tpu_custom_call.1} parent=1 // pred_region
      %327 = dma.done [#allocation3], 32
    $region41: #{tpu_custom_call.1} parent=1 // pred_fallthru
      _
    %328 = vsyncpa [#allocation3], 1

</llo_original>
